<compile_context>
chip_gen: v5e
topology: v5e:2x2
jax: 0.10.0
libtpu: 0.0.40
codegen_flags: <defaults>
</compile_context>

<pallas_src>
import functools

import jax
import jax.numpy as jnp
import numpy as np
from jax.experimental import pallas as pl
from jax.experimental.pallas import tpu as pltpu


def _round_up(v, m):
    return (v + m - 1) // m * m


def _lts_kernel(x_ref, wm_ref, bm_ref, wms_ref, bms_ref, o_ref,
                scale_ref, shift_ref):
    # x_ref    : (BM, F)   flattened input tile (f32 or bf16)
    # wm_ref   : (F, BN)   embedded linear weight tile (f32 or bf16)
    # bm_ref   : (1, BN)   embedded linear bias tile (f32)
    # wms_ref  : (2, F)    mstd_linear weight, transposed (f32)
    # bms_ref  : (1, 2)    mstd_linear bias (f32)
    # o_ref    : (BM, BN)  output tile (f32)
    # scale_ref: (BM, 1)   per-sample scale, persists across the j axis
    # shift_ref: (BM, 1)   per-sample shift, persists across the j axis
    j = pl.program_id(1)

    # mstd_linear (only 2 outputs): computed once per batch tile on the
    # VPU/XLU (broadcast multiply over lanes + cross-lane reduce) instead of a
    # zero-padded MXU dot, and cached in VMEM scratch for all j tiles.
    @pl.when(j == 0)
    def _():
        xf = x_ref[...].astype(jnp.float32)
        scale_ref[...] = (jnp.sum(xf * wms_ref[0:1, :], axis=-1, keepdims=True)
                          + bms_ref[:, 0:1])
        shift_ref[...] = (jnp.sum(xf * wms_ref[1:2, :], axis=-1, keepdims=True)
                          + bms_ref[:, 1:2])

    # Embedded 'linear' model on the MXU, f32 accumulation.
    y = jnp.dot(x_ref[...], wm_ref[...],
                preferred_element_type=jnp.float32) + bm_ref[...]

    # Single fused, lane-dense store per tile.
    o_ref[...] = (y * scale_ref[...] + shift_ref[...]).astype(o_ref.dtype)


@functools.partial(jax.jit, static_argnames=("output_shape", "block_b", "use_bf16"))
def learn_to_scale(x, w_model, b_model, w_mstd, b_mstd, *,
                   output_shape, block_b=256, use_bf16=True):
    """x: (B, H, W). Returns (B,) + output_shape as float32."""
    B, H, W = x.shape
    F = H * W
    TD = int(np.prod(output_shape))

    in_dtype = jnp.bfloat16 if use_bf16 else jnp.float32

    # Batch tile: up to `block_b` rows; pad B (zeros) so the grid divides evenly.
    bm = min(block_b, _round_up(B, 8))
    B_pad = _round_up(B, bm)

    # Pad output lanes to a multiple of 128 and pick an MXU-width N tile.
    TD_pad = _round_up(TD, 128)
    bn = 256 if TD_pad % 256 == 0 else 128

    x_flat = x.reshape(B, F).astype(in_dtype)
    if B_pad != B:
        x_flat = jnp.pad(x_flat, ((0, B_pad - B), (0, 0)))

    wm = w_model.astype(jnp.float32)
    bmod = b_model.astype(jnp.float32)
    if TD_pad != TD:
        wm = jnp.pad(wm, ((0, 0), (0, TD_pad - TD)))
        bmod = jnp.pad(bmod, (0, TD_pad - TD))
    wm = wm.astype(in_dtype)
    bmod = bmod.reshape(1, TD_pad)

    wms = jnp.asarray(w_mstd, jnp.float32).T            # (2, F)
    bms = jnp.asarray(b_mstd, jnp.float32).reshape(1, 2)

    grid = (B_pad // bm, TD_pad // bn)

    out = pl.pallas_call(
        _lts_kernel,
        out_shape=jax.ShapeDtypeStruct((B_pad, TD_pad), jnp.float32),
        grid=grid,
        in_specs=[
            pl.BlockSpec((bm, F), lambda i, j: (i, 0)),     # x tile (re-used over j)
            pl.BlockSpec((F, bn), lambda i, j: (0, j)),     # model weight tile
            pl.BlockSpec((1, bn), lambda i, j: (0, j)),     # model bias tile
            pl.BlockSpec((2, F), lambda i, j: (0, 0)),      # mstd weight (tiny)
            pl.BlockSpec((1, 2), lambda i, j: (0, 0)),      # mstd bias (tiny)
        ],
        out_specs=pl.BlockSpec((bm, bn), lambda i, j: (i, j)),
        scratch_shapes=[
            pltpu.VMEM((bm, 1), jnp.float32),               # per-sample scale
            pltpu.VMEM((bm, 1), jnp.float32),               # per-sample shift
        ],
        compiler_params=pltpu.CompilerParams(
            dimension_semantics=("parallel", "arbitrary")),
    )(x_flat, wm, bmod, wms, bms)

    return out[:B, :TD].reshape((B,) + tuple(output_shape))


def _reference(x, w_model, b_model, w_mstd, b_mstd, output_shape):
    # float64 numpy reference of the PyTorch forward.
    x64 = np.asarray(x, np.float64)
    B, H, W = x64.shape
    xf = x64.reshape(B, H * W)
    y = (xf @ np.asarray(w_model, np.float64) + np.asarray(b_model, np.float64))
    y = y.reshape((B,) + tuple(output_shape))
    t = xf @ np.asarray(w_mstd, np.float64) + np.asarray(b_mstd, np.float64)
    scale = t[:, 0].reshape(B, 1, 1)
    shift = t[:, 1].reshape(B, 1, 1)
    return y * scale + shift


if __name__ == "__main__":
    # Small shapes: input_shape = (H, W) = (16, 16), output_shape = (T, D) = (4, 32)
    B, H, W = 8, 16, 16
    output_shape = (4, 32)
    F = H * W
    TD = int(np.prod(output_shape))

    key = jax.random.PRNGKey(0)
    kx, k1, k2, k3, k4 = jax.random.split(key, 5)

    x = jax.random.normal(kx, (B, H, W), jnp.float32)

    # Deterministic parameter init (PyTorch-Linear-like uniform(+-1/sqrt(fan_in)))
    bound = 1.0 / np.sqrt(F)
    w_model = jax.random.uniform(k1, (F, TD), jnp.float32, -bound, bound)
    b_model = jax.random.uniform(k2, (TD,), jnp.float32, -bound, bound)
    w_mstd = jax.random.uniform(k3, (F, 2), jnp.float32, -bound, bound)
    b_mstd = jax.random.uniform(k4, (2,), jnp.float32, -bound, bound)

    ref = _reference(x, w_model, b_model, w_mstd, b_mstd, output_shape)

    # Full-precision path (tight check).
    out32 = learn_to_scale(x, w_model, b_model, w_mstd, b_mstd,
                           output_shape=output_shape, use_bf16=False)
    out32 = jax.block_until_ready(out32)
    np.testing.assert_allclose(np.asarray(out32, np.float64), ref,
                               rtol=1e-4, atol=1e-4)

    # bf16 fast path (v6e/v7x MXU), f32 accumulation + f32 epilogue (loose check).
    out16 = learn_to_scale(x, w_model, b_model, w_mstd, b_mstd,
                           output_shape=output_shape, use_bf16=True)
    out16 = jax.block_until_ready(out16)
    np.testing.assert_allclose(np.asarray(out16, np.float64), ref,
                               rtol=5e-2, atol=5e-2)

    print("KERNEL_OK")
</pallas_src>

<mosaic_0001>
module attributes {stable_mosaic.version = 11 : i64} {
  func.func @_lts_kernel(%arg0: i32, %arg1: i32, %arg2: memref<8x256xf32, #tpu.memory_space<vmem>>, %arg3: memref<256x128xf32, #tpu.memory_space<vmem>>, %arg4: memref<1x128xf32, #tpu.memory_space<vmem>>, %arg5: memref<2x256xf32, #tpu.memory_space<vmem>>, %arg6: memref<1x2xf32, #tpu.memory_space<vmem>>, %arg7: memref<8x128xf32, #tpu.memory_space<vmem>>, %arg8: memref<8x1xf32, #tpu.memory_space<vmem>>, %arg9: memref<8x1xf32, #tpu.memory_space<vmem>>) attributes {dimension_semantics = [#tpu.dimension_semantics<parallel>, #tpu.dimension_semantics<arbitrary>], iteration_bounds = array<i64: 1, 1>, scalar_prefetch = 0 : i64, scratch_operands = 2 : i64, tpu.core_type = #tpu.core_type<tc>, window_params = [{transform_indices = @transform_0, window_bounds = array<i64: 8, 256>}, {transform_indices = @transform_1, window_bounds = array<i64: 256, 128>}, {transform_indices = @transform_2, window_bounds = array<i64: 1, 128>}, {pipeline_mode = #tpu.pipeline_mode<synchronous>, transform_indices = @transform_3, window_bounds = array<i64: 2, 256>}, {pipeline_mode = #tpu.pipeline_mode<synchronous>, transform_indices = @transform_4, window_bounds = array<i64: 1, 2>}, {transform_indices = @transform_5, window_bounds = array<i64: 8, 128>}]} {
    %c0_i32 = arith.constant 0 : i32
    %0 = arith.cmpi eq, %arg1, %c0_i32 : i32
    %1 = arith.extui %0 : i1 to i32
    %c0_i32_0 = arith.constant 0 : i32
    %2 = arith.cmpi ne, %1, %c0_i32_0 : i32
    scf.if %2 {
      %c0_12 = arith.constant 0 : index
      %c0_13 = arith.constant 0 : index
      %16 = vector.load %arg2[%c0_12, %c0_13] : memref<8x256xf32, #tpu.memory_space<vmem>>, vector<8x256xf32>
      %c0_14 = arith.constant 0 : index
      %c0_15 = arith.constant 0 : index
      %17 = vector.load %arg5[%c0_14, %c0_15] : memref<2x256xf32, #tpu.memory_space<vmem>>, vector<1x256xf32>
      %18 = vector.broadcast %17 : vector<1x256xf32> to vector<8x256xf32>
      %19 = arith.mulf %16, %18 : vector<8x256xf32>
      %cst_16 = arith.constant dense<0.000000e+00> : vector<8xf32>
      %20 = vector.multi_reduction <add>, %19, %cst_16 [1] : vector<8x256xf32> to vector<8xf32>
      %21 = vector.shape_cast %20 : vector<8xf32> to vector<8x1xf32>
      %c0_17 = arith.constant 0 : index
      %c0_18 = arith.constant 0 : index
      %22 = vector.load %arg6[%c0_17, %c0_18] : memref<1x2xf32, #tpu.memory_space<vmem>>, vector<1x1xf32>
      %23 = vector.broadcast %22 : vector<1x1xf32> to vector<8x1xf32>
      %24 = arith.addf %21, %23 : vector<8x1xf32>
      %c0_19 = arith.constant 0 : index
      %c0_20 = arith.constant 0 : index
      %25 = vector.load %arg8[%c0_19, %c0_20] : memref<8x1xf32, #tpu.memory_space<vmem>>, vector<8x1xf32>
      tpu.vector_store %arg8[%c0_19, %c0_20], %24 {strides = array<i32>} : memref<8x1xf32, #tpu.memory_space<vmem>>, vector<8x1xf32>,
      %c1 = arith.constant 1 : index
      %c0_21 = arith.constant 0 : index
      %26 = vector.load %arg5[%c1, %c0_21] : memref<2x256xf32, #tpu.memory_space<vmem>>, vector<1x256xf32>
      %27 = vector.broadcast %26 : vector<1x256xf32> to vector<8x256xf32>
      %28 = arith.mulf %16, %27 : vector<8x256xf32>
      %cst_22 = arith.constant dense<0.000000e+00> : vector<8xf32>
      %29 = vector.multi_reduction <add>, %28, %cst_22 [1] : vector<8x256xf32> to vector<8xf32>
      %30 = vector.shape_cast %29 : vector<8xf32> to vector<8x1xf32>
      %c0_23 = arith.constant 0 : index
      %c1_24 = arith.constant 1 : index
      %31 = vector.load %arg6[%c0_23, %c1_24] : memref<1x2xf32, #tpu.memory_space<vmem>>, vector<1x1xf32>
      %32 = vector.broadcast %31 : vector<1x1xf32> to vector<8x1xf32>
      %33 = arith.addf %30, %32 : vector<8x1xf32>
      %c0_25 = arith.constant 0 : index
      %c0_26 = arith.constant 0 : index
      %34 = vector.load %arg9[%c0_25, %c0_26] : memref<8x1xf32, #tpu.memory_space<vmem>>, vector<8x1xf32>
      tpu.vector_store %arg9[%c0_25, %c0_26], %33 {strides = array<i32>} : memref<8x1xf32, #tpu.memory_space<vmem>>, vector<8x1xf32>,
    } else {
    }
    %c0 = arith.constant 0 : index
    %c0_1 = arith.constant 0 : index
    %3 = vector.load %arg2[%c0, %c0_1] : memref<8x256xf32, #tpu.memory_space<vmem>>, vector<8x256xf32>
    %c0_2 = arith.constant 0 : index
    %c0_3 = arith.constant 0 : index
    %4 = vector.load %arg3[%c0_2, %c0_3] : memref<256x128xf32, #tpu.memory_space<vmem>>, vector<256x128xf32>
    %cst = arith.constant dense<0.000000e+00> : vector<8x128xf32>
    %5 = tpu.matmul %3, %4, %cst {dimension_numbers = #tpu.dot_dimension_numbers<[1], [0], [0], [1], [0, 0, 1, 1], [], []>} : vector<8x256xf32>, vector<256x128xf32>, vector<8x128xf32> -> vector<8x128xf32>
    %c0_4 = arith.constant 0 : index
    %c0_5 = arith.constant 0 : index
    %6 = vector.load %arg4[%c0_4, %c0_5] : memref<1x128xf32, #tpu.memory_space<vmem>>, vector<1x128xf32>
    %7 = vector.broadcast %6 : vector<1x128xf32> to vector<8x128xf32>
    %8 = arith.addf %5, %7 : vector<8x128xf32>
    %c0_6 = arith.constant 0 : index
    %c0_7 = arith.constant 0 : index
    %9 = vector.load %arg8[%c0_6, %c0_7] : memref<8x1xf32, #tpu.memory_space<vmem>>, vector<8x1xf32>
    %10 = vector.broadcast %9 : vector<8x1xf32> to vector<8x128xf32>
    %11 = arith.mulf %8, %10 : vector<8x128xf32>
    %c0_8 = arith.constant 0 : index
    %c0_9 = arith.constant 0 : index
    %12 = vector.load %arg9[%c0_8, %c0_9] : memref<8x1xf32, #tpu.memory_space<vmem>>, vector<8x1xf32>
    %13 = vector.broadcast %12 : vector<8x1xf32> to vector<8x128xf32>
    %14 = arith.addf %11, %13 : vector<8x128xf32>
    %c0_10 = arith.constant 0 : index
    %c0_11 = arith.constant 0 : index
    %15 = vector.load %arg7[%c0_10, %c0_11] : memref<8x128xf32, #tpu.memory_space<vmem>>, vector<8x128xf32>
    tpu.vector_store %arg7[%c0_10, %c0_11], %14 {strides = array<i32>} : memref<8x128xf32, #tpu.memory_space<vmem>>, vector<8x128xf32>,
    return
  }
  func.func @transform_0(%arg0: i32, %arg1: i32) -> (i32, i32) {
    %c0_i32 = arith.constant 0 : i32
    %c0_i32_0 = arith.constant 0 : i32
    return %arg0, %c0_i32 : i32, i32
  }
  func.func @transform_1(%arg0: i32, %arg1: i32) -> (i32, i32) {
    %c0_i32 = arith.constant 0 : i32
    %c0_i32_0 = arith.constant 0 : i32
    return %c0_i32, %arg1 : i32, i32
  }
  func.func @transform_2(%arg0: i32, %arg1: i32) -> (i32, i32) {
    %c0_i32 = arith.constant 0 : i32
    %c0_i32_0 = arith.constant 0 : i32
    return %c0_i32, %arg1 : i32, i32
  }
  func.func @transform_3(%arg0: i32, %arg1: i32) -> (i32, i32) {
    %c0_i32 = arith.constant 0 : i32
    %c0_i32_0 = arith.constant 0 : i32
    %c0_i32_1 = arith.constant 0 : i32
    return %c0_i32, %c0_i32_0 : i32, i32
  }
  func.func @transform_4(%arg0: i32, %arg1: i32) -> (i32, i32) {
    %c0_i32 = arith.constant 0 : i32
    %c0_i32_0 = arith.constant 0 : i32
    %c0_i32_1 = arith.constant 0 : i32
    return %c0_i32, %c0_i32_0 : i32, i32
  }
  func.func @transform_5(%arg0: i32, %arg1: i32) -> (i32, i32) {
    %c0_i32 = arith.constant 0 : i32
    return %arg0, %arg1 : i32, i32
  }
}

</mosaic_0001>

<llo_original>
// kernel: learn_to_scale.1
$region0: #{learn_to_scale.1}
  #allocation0 [shape = 'u32[]', space=smem, size = 0x4, offset = 0x4, fixed_abs, tag = 'smem constant byte address 0x4 - core index']
  #allocation1 [shape = 'u32[72,128]{1,0:T(1,128)}', space=vmem, size = 0x9000, scoped, tag = 'internal scratch']
  #allocation2 [shape = 'f32[8,1]{1,0:T(8,128)}', space=vmem, size = 0x1000, scoped, tag = 'scratch operand']
  #allocation3 [shape = 'f32[8,1]{1,0:T(8,128)}', space=vmem, size = 0x1000, scoped, tag = 'scratch operand']
  %s0 = inlined_call_operand.vmem [shape: f32[8,256], index: 0, kind: input, shape index: {}]
  %s1 = inlined_call_operand.hbm [shape: f32[256,128], index: 1, kind: input, shape index: {}]
  %s2 = inlined_call_operand.vmem [shape: f32[1,128], index: 2, kind: input, shape index: {}]
  %s3 = inlined_call_operand.vmem [shape: f32[2,256], index: 3, kind: input, shape index: {}]
  %s4 = inlined_call_operand.vmem [shape: f32[1,2], index: 4, kind: input, shape index: {}]
  %s5 = inlined_call_operand.vmem [shape: f32[8,128], index: 5, kind: output, shape index: {}]
  %s6 = sld [smem:[#allocation0]]
  $region38: #{learn_to_scale.1} parent=0
    _
  %s8 = ssub.s32 1, %s6
  %s9 = scalar_select 0, %s8, %s6
  $region1: #{learn_to_scale.1} parent=0
    #allocation4 [shape = 'u8[131072]{0}', space=vmem, size = 0x20000, scoped, tag = 'input window, operand 1, single buffered']
    #allocation5 [shape = 's32[1]{0}', space=sflag, size = 0x4, scoped, tag = 'scoped memory for learn_to_scale.1']
    %10 = vsyncpa [#allocation5], 0
    // Predicated region
    $region2: #{learn_to_scale.1} parent=1 // pred_check
      _
    $region3: #{learn_to_scale.1} parent=1 // pred_check_branch
      %12 = sbr.rel (0) target = $region5
    $region4: #{learn_to_scale.1} parent=1 // pred_region
      _
    $region5: #{learn_to_scale.1} parent=1 // pred_fallthru
      _
    // Predicated region
    $region6: #{learn_to_scale.1} parent=1 // pred_check
      _
    $region7: #{learn_to_scale.1} parent=1 // pred_check_branch
      %14 = sbr.rel (0) target = $region9
    $region8: #{learn_to_scale.1} parent=1 // pred_region
      %16 = vsyncadd [#allocation5], 0
      %s17 = sshll.u32 %s1, 4
      %s18 = int_to_ptr.hbm [resolvable:$true] %s17
      %s19 = sshll.u32 [#allocation4], 4
      %s20 = int_to_ptr.vmem [resolvable:$true] %s19
      %25 = dma.hbm_to_vmem [thread:$0]  %s18, 4096, %s20, [#allocation5], 128, 128, 8
    $region9: #{learn_to_scale.1} parent=1 // pred_fallthru
      _
    // Predicated region
    $region10: #{learn_to_scale.1} parent=1 // pred_check
      _
    $region11: #{learn_to_scale.1} parent=1 // pred_check_branch
      %27 = sbr.rel (0) target = $region13
    $region12: #{learn_to_scale.1} parent=1 // pred_region
      _
    $region13: #{learn_to_scale.1} parent=1 // pred_fallthru
      _
    // Predicated region
    $region14: #{learn_to_scale.1} parent=1 // pred_check
      _
    $region15: #{learn_to_scale.1} parent=1 // pred_check_branch
      %29 = sbr.rel (0) target = $region17
    $region16: #{learn_to_scale.1} parent=1 // pred_region
      _
    $region17: #{learn_to_scale.1} parent=1 // pred_fallthru
      _
    // Predicated region
    $region18: #{learn_to_scale.1} parent=1 // pred_check
      _
    $region19: #{learn_to_scale.1} parent=1 // pred_check_branch
      %31 = sbr.rel (0) target = $region21
    $region20: #{learn_to_scale.1} parent=1 // pred_region
      _
    $region21: #{learn_to_scale.1} parent=1 // pred_fallthru
      _
    // Predicated region
    $region22: #{learn_to_scale.1} parent=1 // pred_check
      _
    $region23: #{learn_to_scale.1} parent=1 // pred_check_branch
      %33 = sbr.rel (0) target = $region25
    $region24: #{learn_to_scale.1} parent=1 // pred_region
      %35 = dma.done [#allocation5], 4096
    $region25: #{learn_to_scale.1} parent=1 // pred_fallthru
      _
    %p36 = scmp.eq.s32.totalorder 0, 0
    // Predicated region
    $region26: #{learn_to_scale.1} parent=1 // pred_check
      %p37 = pneg %p36
    $region27: #{learn_to_scale.1} parent=1 // pred_check_branch
      %39 = sbr.rel (%p37) target = $region29
    $region28: #{learn_to_scale.1} parent=1 // pred_region
      %v40 = vld [vmem:[%s0] sm:$0xff]
      %v41 = vld [vmem:[%s0 + $0x8] sm:$0xff]
      %v42 = vld [vmem:[%s3] ss:$2 sm:$0x3]
      %v44 = vperm.slane %v42, 0
      %v45 = vperm.slane %v42, 1
      %v48 = vmul.f32 %v40, %v44
      %v49 = vmul.f32 %v41, %v45
      %v50 = vadd.f32 %v48, %v49
      %51 = vadd.xlane.f32.xlu0 %v50
      %v52 = vpop.xlane.xlu0 %51
      %v53 = vld [vmem:[%s4] sm:$0x1]
      %v55 = vperm.slane %v53, 0
      %v57 = vadd.f32 %v52, %v55
      %vm58 = vcmask 7168
      %59 = vst.msk [vmem:[#allocation2] sm:$0xff] %vm58, %v57
      %s60 = scalar_lea.vmem %s3, 1
      %v61 = vld [vmem:[%s60] ss:$2 sm:$0x3]
      %v63 = vperm.slane %v61, 0
      %v64 = vperm.slane %v61, 1
      %v67 = vmul.f32 %v40, %v63
      %v68 = vmul.f32 %v41, %v64
      %v69 = vadd.f32 %v67, %v68
      %70 = vadd.xlane.f32.xlu0 %v69
      %v71 = vpop.xlane.xlu0 %70
      %v72 = vld [vmem:[%s4] sm:$0x1]
      %v74 = vperm.slane %v72, 0
      %v76 = vadd.f32 %v71, %v74
      %78 = vrot.lane.b32.xlu0 %v76, 127
      %v79 = vpop.permute.xlu0 %78
      %81 = vst.msk [vmem:[#allocation3] sm:$0xff] %vm58, %v79
    $region29: #{learn_to_scale.1} parent=1 // pred_fallthru
      _
    %v82 = vld [vmem:[%s0] sm:$0xff]
    %v83 = vld [vmem:[%s0 + $0x8] sm:$0xff]
    %v84 = vld [vmem:[#allocation4] sm:$0xff]
    %v85 = vld [vmem:[#allocation4 + $0x8] sm:$0xff]
    %v86 = vld [vmem:[#allocation4 + $0x10] sm:$0xff]
    %v87 = vld [vmem:[#allocation4 + $0x18] sm:$0xff]
    %v88 = vld [vmem:[#allocation4 + $0x20] sm:$0xff]
    %v89 = vld [vmem:[#allocation4 + $0x28] sm:$0xff]
    %v90 = vld [vmem:[#allocation4 + $0x30] sm:$0xff]
    %v91 = vld [vmem:[#allocation4 + $0x38] sm:$0xff]
    %v92 = vld [vmem:[#allocation4 + $0x40] sm:$0xff]
    %v93 = vld [vmem:[#allocation4 + $0x48] sm:$0xff]
    %v94 = vld [vmem:[#allocation4 + $0x50] sm:$0xff]
    %v95 = vld [vmem:[#allocation4 + $0x58] sm:$0xff]
    %v96 = vld [vmem:[#allocation4 + $0x60] sm:$0xff]
    %v97 = vld [vmem:[#allocation4 + $0x68] sm:$0xff]
    %v98 = vld [vmem:[#allocation4 + $0x70] sm:$0xff]
    %v99 = vld [vmem:[#allocation4 + $0x78] sm:$0xff]
    %v100 = vld [vmem:[#allocation4 + $0x80] sm:$0xff]
    %v101 = vld [vmem:[#allocation4 + $0x88] sm:$0xff]
    %v102 = vld [vmem:[#allocation4 + $0x90] sm:$0xff]
    %v103 = vld [vmem:[#allocation4 + $0x98] sm:$0xff]
    %v104 = vld [vmem:[#allocation4 + $0xa0] sm:$0xff]
    %v105 = vld [vmem:[#allocation4 + $0xa8] sm:$0xff]
    %v106 = vld [vmem:[#allocation4 + $0xb0] sm:$0xff]
    %v107 = vld [vmem:[#allocation4 + $0xb8] sm:$0xff]
    %v108 = vld [vmem:[#allocation4 + $0xc0] sm:$0xff]
    %v109 = vld [vmem:[#allocation4 + $0xc8] sm:$0xff]
    %v110 = vld [vmem:[#allocation4 + $0xd0] sm:$0xff]
    %v111 = vld [vmem:[#allocation4 + $0xd8] sm:$0xff]
    %v112 = vld [vmem:[#allocation4 + $0xe0] sm:$0xff]
    %v113 = vld [vmem:[#allocation4 + $0xe8] sm:$0xff]
    %v114 = vld [vmem:[#allocation4 + $0xf0] sm:$0xff]
    %v115 = vld [vmem:[#allocation4 + $0xf8] sm:$0xff]
    %v116 = vld [vmem:[%s2] sm:$0x1]
    %v118 = vperm.slane %v116, 0
    %120 = vmatpush.msra.mxu0 %v99
    %121 = vmatpush.msra.mxu0 %v98
    %122 = vmatpush.msra.mxu0 %v97
    %123 = vmatpush.msra.mxu0 %v96
    %124 = vmatpush.msra.mxu0 %v95
    %125 = vmatpush.msra.mxu0 %v94
    %126 = vmatpush.msra.mxu0 %v93
    %127 = vmatpush.msra.mxu0 %v92
    %128 = vmatpush.msra.mxu0 %v91
    %129 = vmatpush.msra.mxu0 %v90
    %130 = vmatpush.msra.mxu0 %v89
    %131 = vmatpush.msra.mxu0 %v88
    %132 = vmatpush.msra.mxu0 %v87
    %133 = vmatpush.msra.mxu0 %v86
    %134 = vmatpush.msra.mxu0 %v85
    %135 = vmatpush.msra.mxu0 %v84
    %136 = vmatmul.f32.gmra.mxu0 %v82
    %v137 = vpop.f32.mrf.mxu0
    %v138 = vadd.f32 %v118, %v137
    %139 = vdwg.mxu0
    %140 = vmatpush.msra.mxu0 %v115
    %141 = vmatpush.msra.mxu0 %v114
    %142 = vmatpush.msra.mxu0 %v113
    %143 = vmatpush.msra.mxu0 %v112
    %144 = vmatpush.msra.mxu0 %v111
    %145 = vmatpush.msra.mxu0 %v110
    %146 = vmatpush.msra.mxu0 %v109
    %147 = vmatpush.msra.mxu0 %v108
    %148 = vmatpush.msra.mxu0 %v107
    %149 = vmatpush.msra.mxu0 %v106
    %150 = vmatpush.msra.mxu0 %v105
    %151 = vmatpush.msra.mxu0 %v104
    %152 = vmatpush.msra.mxu0 %v103
    %153 = vmatpush.msra.mxu0 %v102
    %154 = vmatpush.msra.mxu0 %v101
    %155 = vmatpush.msra.mxu0 %v100
    %156 = vmatmul.f32.gmra.mxu0 %v83
    %v157 = vpop.f32.mrf.mxu0
    %v158 = vadd.f32 %v138, %v157
    %159 = vdwg.mxu0
    %v160 = vld [vmem:[#allocation2] sm:$0xff]
    %162 = vset.pattern.permute.xlu0 0
    %163 = vperm.xlu0 %162, %v160
    %v164 = vpop.permute.xlu0 %163
    %v166 = vmul.f32 %v158, %v164
    %v167 = vld [vmem:[#allocation3] sm:$0xff]
    %169 = vset.pattern.permute.xlu0 0
    %170 = vperm.xlu0 %169, %v167
    %v171 = vpop.permute.xlu0 %170
    %v173 = vadd.f32 %v166, %v171
    %174 = vst [vmem:[%s5] sm:$0xff] %v173
    // Predicated region
    $region30: #{learn_to_scale.1} parent=1 // pred_check
      _
    $region31: #{learn_to_scale.1} parent=1 // pred_check_branch
      %176 = sbr.rel (0) target = $region33
    $region32: #{learn_to_scale.1} parent=1 // pred_region
      _
    $region33: #{learn_to_scale.1} parent=1 // pred_fallthru
      _
    // Predicated region
    $region34: #{learn_to_scale.1} parent=1 // pred_check
      _
    $region35: #{learn_to_scale.1} parent=1 // pred_check_branch
      %178 = sbr.rel (0) target = $region37
    $region36: #{learn_to_scale.1} parent=1 // pred_region
      _
    $region37: #{learn_to_scale.1} parent=1 // pred_fallthru
      _
    %179 = vsyncpa [#allocation5], 1

</llo_original>
